<compile_context>
chip_gen: v5e
topology: v5e:2x2
jax: 0.10.0
libtpu: 0.0.40
codegen_flags: <defaults>
</compile_context>

<pallas_src>
import functools

import jax
import jax.numpy as jnp
from jax import lax
from jax.experimental import pallas as pl
from jax.experimental.pallas import tpu as pltpu

_MIB = 1024 * 1024


def _round_up(a: int, b: int) -> int:
    return (a + b - 1) // b * b


def _vmem_capacity_bytes() -> int:
    try:
        info = pltpu.get_tpu_info()
        cap = int(getattr(info, "vmem_capacity_bytes", 0))
        if cap > 0:
            return cap
    except Exception:
        pass
    return 128 * _MIB


def _tile_policy(hidden: int, *, tm=None, tv=None, vmem_limit_bytes=None):
    """Generation-aware defaults for (tm, tv, vmem_limit)."""
    cap = _vmem_capacity_bytes()
    small_vmem = cap <= 80 * _MIB  # v7x-class (64 MiB / TC)
    if vmem_limit_bytes is None:
        vmem_limit_bytes = max(32 * _MIB,
                               min((56 if small_vmem else 96) * _MIB, cap - 4 * _MIB))
    if tv is None:
        tv = 1024 if (small_vmem and hidden >= 4096) else 2048
        # keep the double-buffered bf16 weight tile (2 * H * tv * 2B) within ~40% of budget
        max_tv = (int(0.4 * vmem_limit_bytes) // (4 * hidden)) // 128 * 128
        tv = min(tv, max_tv) if max_tv >= 128 else 128
    if tm is None:
        tm = 512
        # keep the double-buffered bf16 x tile (2 * tm * H * 2B) within ~25% of budget
        max_tm = (int(0.25 * vmem_limit_bytes) // (4 * hidden)) // 16 * 16
        tm = min(tm, max_tm) if max_tm >= 128 else 128
    return tm, tv, vmem_limit_bytes


def prepare_weight(w, *, tv=None, compute_dtype=jnp.bfloat16):
    """One-time parameter prep for the PyTorch nn.Linear weight (shape [vocab, hidden]).

    Returns (w_t, vocab, tv) with w_t of shape [hidden, padded_vocab] in `compute_dtype`.
    Do this once at init — the forward never copies / casts the weight again.
    """
    vocab, hidden = w.shape
    _, tv, _ = _tile_policy(hidden, tv=tv)
    tv_eff = min(tv, _round_up(vocab, 128))
    padded_v = _round_up(vocab, tv_eff)
    w_t = w.astype(compute_dtype).T  # [hidden, vocab]
    if padded_v != vocab:
        w_t = jnp.pad(w_t, ((0, 0), (0, padded_v - vocab)))
    return w_t, vocab, tv_eff


# ---------------------------------------------------------------------------
# Single-pass kernel: matmul + online LSE, log-probs written once per row tile.
# ---------------------------------------------------------------------------
def _fused_logprob_kernel(x_ref, w_ref, out_ref, acc_ref, m_ref, l_ref, *,
                          vocab, tv, n_vocab_tiles, mask_cols):
    j = pl.program_id(1)

    @pl.when(j == 0)
    def _init():
        m_ref[...] = jnp.full(m_ref.shape, -jnp.inf, m_ref.dtype)
        l_ref[...] = jnp.zeros(l_ref.shape, l_ref.dtype)

    # [tm, H] @ [H, tv] -> [tm, tv] on the MXU, f32 accumulation.
    logits = jnp.dot(x_ref[...], w_ref[...], preferred_element_type=jnp.float32)

    # Stash the raw f32 logits of this vocab tile in the VMEM stripe scratch.
    acc_ref[j] = logits

    # Mask only the LSE reduction (padded vocab tail); stored logits are sliced off.
    lse_logits = logits
    if mask_cols:
        col = j * tv + lax.broadcasted_iota(jnp.int32, (1, tv), 1)
        lse_logits = jnp.where(col < vocab, logits, -jnp.inf)

    m_prev = m_ref[...]
    m_new = jnp.maximum(m_prev, jnp.max(lse_logits, axis=-1, keepdims=True))
    alpha = jnp.exp(m_prev - m_new)
    l_ref[...] = alpha * l_ref[...] + jnp.sum(jnp.exp(lse_logits - m_new),
                                              axis=-1, keepdims=True)
    m_ref[...] = m_new

    @pl.when(j == n_vocab_tiles - 1)
    def _finalize():
        lse = m_ref[...] + jnp.log(l_ref[...])  # (tm, 1) f32
        for k in range(n_vocab_tiles):          # static unroll; static lane offsets
            out_ref[:, k * tv:(k + 1) * tv] = (acc_ref[k] - lse).astype(out_ref.dtype)


# ---------------------------------------------------------------------------
# Two-pass fallback kernels (vocab stripe too large for VMEM residency).
# ---------------------------------------------------------------------------
def _logits_lse_kernel(x_ref, w_ref, logits_ref, lse_ref, m_ref, l_ref, *,
                       vocab, tv, mask_cols):
    j = pl.program_id(1)

    @pl.when(j == 0)
    def _init():
        m_ref[...] = jnp.full(m_ref.shape, -jnp.inf, m_ref.dtype)
        l_ref[...] = jnp.zeros(l_ref.shape, l_ref.dtype)

    logits = jnp.dot(x_ref[...], w_ref[...], preferred_element_type=jnp.float32)
    logits_ref[...] = logits.astype(logits_ref.dtype)  # bf16 intermediate by default

    lse_logits = logits
    if mask_cols:
        col = j * tv + lax.broadcasted_iota(jnp.int32, (1, tv), 1)
        lse_logits = jnp.where(col < vocab, logits, -jnp.inf)

    m_prev = m_ref[...]
    m_new = jnp.maximum(m_prev, jnp.max(lse_logits, axis=-1, keepdims=True))
    alpha = jnp.exp(m_prev - m_new)
    l_ref[...] = alpha * l_ref[...] + jnp.sum(jnp.exp(lse_logits - m_new),
                                              axis=-1, keepdims=True)
    m_ref[...] = m_new

    @pl.when(j == pl.num_programs(1) - 1)
    def _finalize():
        lse_ref[...] = m_ref[...] + jnp.log(l_ref[...])


def _sub_lse_kernel(logits_ref, lse_ref, o_ref):
    o_ref[...] = (logits_ref[...].astype(jnp.float32) - lse_ref[...]).astype(o_ref.dtype)


# ---------------------------------------------------------------------------
# Wrapper
# ---------------------------------------------------------------------------
def generator_forward(x, prepared, *, tm=None, out_dtype=jnp.float32,
                      intermediate_dtype=jnp.bfloat16,
                      vmem_limit_bytes=None, force_two_pass=False):
    """log_softmax(x @ W.T, axis=-1) with W prepared via prepare_weight().

    x: [..., hidden];  prepared = (w_t [hidden, padded_vocab], vocab, tv).
    Returns [..., vocab] in `out_dtype`.
    Note: the two-pass fallback stores bf16 intermediate logits, so exp(log_probs)
    sums to 1 only to ~1e-3 per row (acceptable for loss computation).
    """
    w_t, vocab, tv = prepared
    hidden, padded_v = w_t.shape
    assert x.shape[-1] == hidden
    assert tv % 128 == 0 and padded_v % tv == 0

    tm, _, vmem_limit_bytes = _tile_policy(hidden, tm=tm, tv=tv,
                                           vmem_limit_bytes=vmem_limit_bytes)
    assert tm % 16 == 0, "row tile must be a multiple of 16 (bf16 sublane packing)"

    orig_shape = x.shape
    # Normalize both operands to the (bf16) compute dtype — never mixed precision.
    x2d = x.reshape(-1, hidden).astype(w_t.dtype)
    n = x2d.shape[0]

    tm_eff = min(tm, _round_up(n, 16))
    padded_n = _round_up(n, tm_eff)
    if padded_n != n:  # small N-tail pad of activations only; the weight is never touched
        x2d = jnp.pad(x2d, ((0, padded_n - n), (0, 0)))

    n_vocab_tiles = padded_v // tv
    mask_cols = padded_v != vocab
    out_itemsize = jnp.dtype(out_dtype).itemsize
    in_itemsize = jnp.dtype(x2d.dtype).itemsize

    def _single_pass_bytes(tm_c):
        acc = 4 * tm_c * padded_v                    # f32 logits stripe scratch
        outb = 2 * out_itemsize * tm_c * padded_v    # (double-buffered) output stripe
        xb = 2 * in_itemsize * tm_c * hidden
        wb = 2 * in_itemsize * hidden * tv
        return acc + outb + xb + wb + 8 * tm_c + (2 << 20)

    budget = int(0.85 * vmem_limit_bytes)
    tm_single = None
    if not force_two_pass:
        cands = [tm_eff] + ([tm_eff // 2] if tm_eff >= 256 else [])
        for cand in cands:
            if cand % 16 == 0 and padded_n % cand == 0 and _single_pass_bytes(cand) <= budget:
                tm_single = cand
                break

    if tm_single is not None:
        # ---- single pass: logits stripe resident in VMEM, one N*V write ----
        kernel = functools.partial(_fused_logprob_kernel, vocab=vocab, tv=tv,
                                   n_vocab_tiles=n_vocab_tiles, mask_cols=mask_cols)
        out_padded = pl.pallas_call(
            kernel,
            out_shape=jax.ShapeDtypeStruct((padded_n, padded_v), out_dtype),
            grid_spec=pltpu.PrefetchScalarGridSpec(
                num_scalar_prefetch=0,
                grid=(padded_n // tm_single, n_vocab_tiles),
                in_specs=[
                    pl.BlockSpec((tm_single, hidden), lambda i, j: (i, 0)),
                    pl.BlockSpec((hidden, tv), lambda i, j: (0, j)),
                ],
                out_specs=pl.BlockSpec((tm_single, padded_v), lambda i, j: (i, 0)),
                scratch_shapes=[
                    pltpu.VMEM((n_vocab_tiles, tm_single, tv), jnp.float32),  # logits stripe
                    pltpu.VMEM((tm_single, 1), jnp.float32),                  # running max
                    pltpu.VMEM((tm_single, 1), jnp.float32),                  # running sum
                ],
            ),
            compiler_params=pltpu.CompilerParams(
                dimension_semantics=("parallel", "arbitrary"),
                vmem_limit_bytes=vmem_limit_bytes,
            ),
        )(x2d, w_t)
    else:
        # ---- two-pass fallback: bf16 intermediate logits + LSE, then subtract ----
        n_row_tiles = padded_n // tm_eff
        kernel_a = functools.partial(_logits_lse_kernel, vocab=vocab, tv=tv,
                                     mask_cols=mask_cols)
        logits, lse = pl.pallas_call(
            kernel_a,
            out_shape=(
                jax.ShapeDtypeStruct((padded_n, padded_v), intermediate_dtype),
                jax.ShapeDtypeStruct((padded_n, 1), jnp.float32),
            ),
            grid_spec=pltpu.PrefetchScalarGridSpec(
                num_scalar_prefetch=0,
                grid=(n_row_tiles, n_vocab_tiles),
                in_specs=[
                    pl.BlockSpec((tm_eff, hidden), lambda i, j: (i, 0)),
                    pl.BlockSpec((hidden, tv), lambda i, j: (0, j)),
                ],
                out_specs=[
                    pl.BlockSpec((tm_eff, tv), lambda i, j: (i, j)),
                    pl.BlockSpec((tm_eff, 1), lambda i, j: (i, 0)),
                ],
                scratch_shapes=[
                    pltpu.VMEM((tm_eff, 1), jnp.float32),
                    pltpu.VMEM((tm_eff, 1), jnp.float32),
                ],
            ),
            compiler_params=pltpu.CompilerParams(
                dimension_semantics=("parallel", "arbitrary"),
                vmem_limit_bytes=vmem_limit_bytes,
            ),
        )(x2d, w_t)

        aliases = {0: 0} if jnp.dtype(intermediate_dtype) == jnp.dtype(out_dtype) else {}
        out_padded = pl.pallas_call(
            _sub_lse_kernel,
            out_shape=jax.ShapeDtypeStruct((padded_n, padded_v), out_dtype),
            grid=(n_row_tiles, n_vocab_tiles),
            in_specs=[
                pl.BlockSpec((tm_eff, tv), lambda i, j: (i, j)),
                pl.BlockSpec((tm_eff, 1), lambda i, j: (i, 0)),
            ],
            out_specs=pl.BlockSpec((tm_eff, tv), lambda i, j: (i, j)),
            input_output_aliases=aliases,
            compiler_params=pltpu.CompilerParams(
                dimension_semantics=("parallel", "parallel"),
                vmem_limit_bytes=vmem_limit_bytes,
            ),
        )(logits, lse)

    out = out_padded[:n, :vocab]
    return out.reshape(*orig_shape[:-1], vocab)


if __name__ == "__main__":
    # Small shapes exercising: row padding (N=18 -> 32, tm=16 -> 2 row tiles),
    # vocab tiling (vocab=300, tv=128 -> 3 vocab tiles) and vocab-tail LSE masking.
    batch, seq, hidden, vocab = 2, 9, 64, 300

    key = jax.random.PRNGKey(0)
    kx, kw = jax.random.split(key)
    x = jax.random.normal(kx, (batch, seq, hidden), dtype=jnp.float32)
    # nn.Linear(hidden, vocab, bias=False).weight has shape [vocab, hidden]
    w = jax.random.normal(kw, (vocab, hidden), dtype=jnp.float32) * 0.05

    # One-time parameter prep (bf16 cast + transpose + vocab pad) — not per call.
    w_t, vocab_, tv_ = prepare_weight(w, tv=128)
    prepared = (w_t, vocab_, tv_)

    # Reference in plain JAX with the same bf16 operand cast + f32 accumulation.
    logits_f32 = jnp.einsum("bsh,vh->bsv", x.astype(jnp.bfloat16),
                            w.astype(jnp.bfloat16),
                            preferred_element_type=jnp.float32)
    ref = jax.nn.log_softmax(logits_f32, axis=-1)

    # 1) Single-pass (VMEM-resident logits stripe) path.
    fwd1 = jax.jit(lambda x_, w_: generator_forward(x_, (w_, vocab_, tv_), tm=16))
    out1 = jax.block_until_ready(fwd1(x, w_t))
    assert out1.shape == (batch, seq, vocab)
    err1 = float(jnp.max(jnp.abs(out1 - ref)))
    assert jnp.allclose(out1, ref, atol=2e-4, rtol=2e-4), f"single-pass max err = {err1}"

    # 2) Forced two-pass fallback path (bf16 intermediate logits -> looser tolerance).
    fwd2 = jax.jit(lambda x_, w_: generator_forward(x_, (w_, vocab_, tv_), tm=16,
                                                    force_two_pass=True))
    out2 = jax.block_until_ready(fwd2(x, w_t))
    assert out2.shape == (batch, seq, vocab)
    err2 = float(jnp.max(jnp.abs(out2 - ref)))
    assert jnp.allclose(out2, ref, atol=2e-2, rtol=2e-2), f"two-pass max err = {err2}"

    print("KERNEL_OK")
</pallas_src>

<mosaic_0001>
module attributes {stable_mosaic.version = 11 : i64} {
  func.func @_fused_logprob_kernel(%arg0: i32, %arg1: i32, %arg2: memref<16x64xbf16, #tpu.memory_space<vmem>>, %arg3: memref<64x128xbf16, #tpu.memory_space<vmem>>, %arg4: memref<16x384xf32, #tpu.memory_space<vmem>>, %arg5: memref<3x16x128xf32, #tpu.memory_space<vmem>>, %arg6: memref<16x1xf32, #tpu.memory_space<vmem>>, %arg7: memref<16x1xf32, #tpu.memory_space<vmem>>) attributes {dimension_semantics = [#tpu.dimension_semantics<parallel>, #tpu.dimension_semantics<arbitrary>], iteration_bounds = array<i64: 2, 3>, scalar_prefetch = 0 : i64, scratch_operands = 3 : i64, tpu.core_type = #tpu.core_type<tc>, window_params = [{transform_indices = @transform_0, window_bounds = array<i64: 16, 64>}, {transform_indices = @transform_1, window_bounds = array<i64: 64, 128>}, {transform_indices = @transform_2, window_bounds = array<i64: 16, 384>}]} {
    %c0_i32 = arith.constant 0 : i32
    %0 = arith.cmpi eq, %arg1, %c0_i32 : i32
    %1 = arith.extui %0 : i1 to i32
    %c0_i32_0 = arith.constant 0 : i32
    %2 = arith.cmpi ne, %1, %c0_i32_0 : i32
    scf.if %2 {
      %cst_18 = arith.constant 0xFF800000 : f32
      %39 = vector.broadcast %cst_18 : f32 to vector<16x1xf32>
      %c0_19 = arith.constant 0 : index
      %c0_20 = arith.constant 0 : index
      %40 = vector.load %arg6[%c0_19, %c0_20] : memref<16x1xf32, #tpu.memory_space<vmem>>, vector<16x1xf32>
      tpu.vector_store %arg6[%c0_19, %c0_20], %39 {strides = array<i32>} : memref<16x1xf32, #tpu.memory_space<vmem>>, vector<16x1xf32>,
      %cst_21 = arith.constant 0.000000e+00 : f32
      %41 = vector.broadcast %cst_21 : f32 to vector<16x1xf32>
      %c0_22 = arith.constant 0 : index
      %c0_23 = arith.constant 0 : index
      %42 = vector.load %arg7[%c0_22, %c0_23] : memref<16x1xf32, #tpu.memory_space<vmem>>, vector<16x1xf32>
      tpu.vector_store %arg7[%c0_22, %c0_23], %41 {strides = array<i32>} : memref<16x1xf32, #tpu.memory_space<vmem>>, vector<16x1xf32>,
    } else {
    }
    %c0 = arith.constant 0 : index
    %c0_1 = arith.constant 0 : index
    %3 = vector.load %arg2[%c0, %c0_1] : memref<16x64xbf16, #tpu.memory_space<vmem>>, vector<16x64xbf16>
    %c0_2 = arith.constant 0 : index
    %c0_3 = arith.constant 0 : index
    %4 = vector.load %arg3[%c0_2, %c0_3] : memref<64x128xbf16, #tpu.memory_space<vmem>>, vector<64x128xbf16>
    %cst = arith.constant dense<0.000000e+00> : vector<16x128xf32>
    %5 = tpu.matmul %3, %4, %cst {dimension_numbers = #tpu.dot_dimension_numbers<[1], [0], [0], [1], [0, 0, 1, 1], [], []>} : vector<16x64xbf16>, vector<64x128xbf16>, vector<16x128xf32> -> vector<16x128xf32>
    %6 = arith.index_cast %arg1 : i32 to index
    %c0_4 = arith.constant 0 : index
    %c0_5 = arith.constant 0 : index
    %7 = vector.load %arg5[%6, %c0_4, %c0_5] : memref<3x16x128xf32, #tpu.memory_space<vmem>>, vector<1x16x128xf32>
    %8 = vector.shape_cast %7 : vector<1x16x128xf32> to vector<16x128xf32>
    %9 = vector.shape_cast %5 : vector<16x128xf32> to vector<1x16x128xf32>
    tpu.vector_store %arg5[%6, %c0_4, %c0_5], %9 {strides = array<i32>} : memref<3x16x128xf32, #tpu.memory_space<vmem>>, vector<1x16x128xf32>,
    %c128_i32 = arith.constant 128 : i32
    %10 = arith.muli %arg1, %c128_i32 : i32
    %11 = tpu.iota {dimensions = array<i32: 1>} : vector<1x128xi32>
    %12 = vector.broadcast %10 : i32 to vector<1x128xi32>
    %13 = arith.addi %12, %11 : vector<1x128xi32>
    %c300_i32 = arith.constant 300 : i32
    %14 = vector.broadcast %c300_i32 : i32 to vector<1x128xi32>
    %15 = arith.cmpi slt, %13, %14 : vector<1x128xi32>
    %cst_6 = arith.constant 0xFF800000 : f32
    %16 = vector.shape_cast %15 : vector<1x128xi1> to vector<1x128xi1>
    %17 = vector.broadcast %16 : vector<1x128xi1> to vector<16x128xi1>
    %18 = vector.broadcast %cst_6 : f32 to vector<16x128xf32>
    %19 = arith.select %17, %5, %18 : vector<16x128xi1>, vector<16x128xf32>
    %c0_7 = arith.constant 0 : index
    %c0_8 = arith.constant 0 : index
    %20 = vector.load %arg6[%c0_7, %c0_8] : memref<16x1xf32, #tpu.memory_space<vmem>>, vector<16x1xf32>
    %cst_9 = arith.constant dense<0xFF800000> : vector<16xf32>
    %21 = vector.multi_reduction <maximumf>, %19, %cst_9 [1] : vector<16x128xf32> to vector<16xf32>
    %22 = vector.shape_cast %21 : vector<16xf32> to vector<16x1xf32>
    %23 = arith.maximumf %20, %22 : vector<16x1xf32>
    %24 = arith.subf %20, %23 : vector<16x1xf32>
    %25 = math.exp %24 : vector<16x1xf32>
    %c0_10 = arith.constant 0 : index
    %c0_11 = arith.constant 0 : index
    %26 = vector.load %arg7[%c0_10, %c0_11] : memref<16x1xf32, #tpu.memory_space<vmem>>, vector<16x1xf32>
    %27 = arith.mulf %25, %26 : vector<16x1xf32>
    %28 = vector.broadcast %23 : vector<16x1xf32> to vector<16x128xf32>
    %29 = arith.subf %19, %28 : vector<16x128xf32>
    %30 = math.exp %29 : vector<16x128xf32>
    %cst_12 = arith.constant dense<0.000000e+00> : vector<16xf32>
    %31 = vector.multi_reduction <add>, %30, %cst_12 [1] : vector<16x128xf32> to vector<16xf32>
    %32 = vector.shape_cast %31 : vector<16xf32> to vector<16x1xf32>
    %33 = arith.addf %27, %32 : vector<16x1xf32>
    %c0_13 = arith.constant 0 : index
    %c0_14 = arith.constant 0 : index
    %34 = vector.load %arg7[%c0_13, %c0_14] : memref<16x1xf32, #tpu.memory_space<vmem>>, vector<16x1xf32>
    tpu.vector_store %arg7[%c0_13, %c0_14], %33 {strides = array<i32>} : memref<16x1xf32, #tpu.memory_space<vmem>>, vector<16x1xf32>,
    %c0_15 = arith.constant 0 : index
    %c0_16 = arith.constant 0 : index
    %35 = vector.load %arg6[%c0_15, %c0_16] : memref<16x1xf32, #tpu.memory_space<vmem>>, vector<16x1xf32>
    tpu.vector_store %arg6[%c0_15, %c0_16], %23 {strides = array<i32>} : memref<16x1xf32, #tpu.memory_space<vmem>>, vector<16x1xf32>,
    %c2_i32 = arith.constant 2 : i32
    %36 = arith.cmpi eq, %arg1, %c2_i32 : i32
    %37 = arith.extui %36 : i1 to i32
    %c0_i32_17 = arith.constant 0 : i32
    %38 = arith.cmpi ne, %37, %c0_i32_17 : i32
    scf.if %38 {
      %c0_18 = arith.constant 0 : index
      %c0_19 = arith.constant 0 : index
      %39 = vector.load %arg6[%c0_18, %c0_19] : memref<16x1xf32, #tpu.memory_space<vmem>>, vector<16x1xf32>
      %c0_20 = arith.constant 0 : index
      %c0_21 = arith.constant 0 : index
      %40 = vector.load %arg7[%c0_20, %c0_21] : memref<16x1xf32, #tpu.memory_space<vmem>>, vector<16x1xf32>
      %41 = math.log %40 : vector<16x1xf32>
      %42 = arith.addf %39, %41 : vector<16x1xf32>
      %c0_22 = arith.constant 0 : index
      %c0_23 = arith.constant 0 : index
      %c0_24 = arith.constant 0 : index
      %43 = vector.load %arg5[%c0_22, %c0_23, %c0_24] : memref<3x16x128xf32, #tpu.memory_space<vmem>>, vector<1x16x128xf32>
      %44 = vector.shape_cast %43 : vector<1x16x128xf32> to vector<16x128xf32>
      %45 = vector.broadcast %42 : vector<16x1xf32> to vector<16x128xf32>
      %46 = arith.subf %44, %45 : vector<16x128xf32>
      %c0_25 = arith.constant 0 : index
      %c0_26 = arith.constant 0 : index
      %47 = vector.load %arg4[%c0_25, %c0_26] : memref<16x384xf32, #tpu.memory_space<vmem>>, vector<16x128xf32>
      tpu.vector_store %arg4[%c0_25, %c0_26], %46 {strides = array<i32>} : memref<16x384xf32, #tpu.memory_space<vmem>>, vector<16x128xf32>,
      %c1 = arith.constant 1 : index
      %c0_27 = arith.constant 0 : index
      %c0_28 = arith.constant 0 : index
      %48 = vector.load %arg5[%c1, %c0_27, %c0_28] : memref<3x16x128xf32, #tpu.memory_space<vmem>>, vector<1x16x128xf32>
      %49 = vector.shape_cast %48 : vector<1x16x128xf32> to vector<16x128xf32>
      %50 = vector.broadcast %42 : vector<16x1xf32> to vector<16x128xf32>
      %51 = arith.subf %49, %50 : vector<16x128xf32>
      %c0_29 = arith.constant 0 : index
      %c128 = arith.constant 128 : index
      %52 = vector.load %arg4[%c0_29, %c128] : memref<16x384xf32, #tpu.memory_space<vmem>>, vector<16x128xf32>
      tpu.vector_store %arg4[%c0_29, %c128], %51 {strides = array<i32>} : memref<16x384xf32, #tpu.memory_space<vmem>>, vector<16x128xf32>,
      %c2 = arith.constant 2 : index
      %c0_30 = arith.constant 0 : index
      %c0_31 = arith.constant 0 : index
      %53 = vector.load %arg5[%c2, %c0_30, %c0_31] : memref<3x16x128xf32, #tpu.memory_space<vmem>>, vector<1x16x128xf32>
      %54 = vector.shape_cast %53 : vector<1x16x128xf32> to vector<16x128xf32>
      %55 = vector.broadcast %42 : vector<16x1xf32> to vector<16x128xf32>
      %56 = arith.subf %54, %55 : vector<16x128xf32>
      %c0_32 = arith.constant 0 : index
      %c256 = arith.constant 256 : index
      %57 = vector.load %arg4[%c0_32, %c256] : memref<16x384xf32, #tpu.memory_space<vmem>>, vector<16x128xf32>
      tpu.vector_store %arg4[%c0_32, %c256], %56 {strides = array<i32>} : memref<16x384xf32, #tpu.memory_space<vmem>>, vector<16x128xf32>,
    } else {
    }
    return
  }
  func.func @transform_0(%arg0: i32, %arg1: i32) -> (i32, i32) {
    %c0_i32 = arith.constant 0 : i32
    %c0_i32_0 = arith.constant 0 : i32
    return %arg0, %c0_i32 : i32, i32
  }
  func.func @transform_1(%arg0: i32, %arg1: i32) -> (i32, i32) {
    %c0_i32 = arith.constant 0 : i32
    %c0_i32_0 = arith.constant 0 : i32
    return %c0_i32, %arg1 : i32, i32
  }
  func.func @transform_2(%arg0: i32, %arg1: i32) -> (i32, i32) {
    %c0_i32 = arith.constant 0 : i32
    %c0_i32_0 = arith.constant 0 : i32
    return %arg0, %c0_i32 : i32, i32
  }
}

</mosaic_0001>

<llo_original>
// kernel: _lambda_.1
$region0: #{_lambda_.1}
  #allocation0 [shape = 'u32[]', space=smem, size = 0x4, offset = 0x4, fixed_abs, tag = 'smem constant byte address 0x4 - core index']
  #allocation1 [shape = 'u32[72,128]{1,0:T(1,128)}', space=vmem, size = 0x9000, scoped, tag = 'internal scratch']
  #allocation2 [shape = 'f32[3,16,128]{2,1,0:T(8,128)}', space=vmem, size = 0x6000, scoped, tag = 'scratch operand']
  #allocation3 [shape = 'f32[16,1]{1,0:T(8,128)}', space=vmem, size = 0x2000, scoped, tag = 'scratch operand']
  #allocation4 [shape = 'f32[16,1]{1,0:T(8,128)}', space=vmem, size = 0x2000, scoped, tag = 'scratch operand']
  %s0 = inlined_call_operand.vmem [shape: bf16[32,64], index: 0, kind: input, shape index: {}]
  %s1 = inlined_call_operand.vmem [shape: bf16[64,384], index: 1, kind: input, shape index: {}]
  %s2 = inlined_call_operand.vmem [shape: f32[32,384], index: 2, kind: output, shape index: {}]
  %s3 = sld [smem:[#allocation0]]
  $region90: #{_lambda_.1} parent=0
    _
  %s5 = ssub.s32 1, %s3
  %s6 = scalar_select 0, %s5, %s3
  $region1: #{_lambda_.1} parent=0
    #allocation5 [shape = 'u8[32768]{0}', space=vmem, size = 0x8000, scoped, tag = 'input window, operand 1']
    loop: start=0, step=1, limit=8
    $region2: #{_lambda_.1} parent=1 // loop_pre_header
      _
    $region3: #{_lambda_.1} parent=1 // loop_header
      %s8 = sphi 0, %s12
      %p9 = scmp.ge.s32.totalorder %s8, 8
      %s15 = sphi 0, %s27
      %s16 = sphi 0, %s23
      %s17 = sphi 0, %s15
      %s18 = sphi 0, %s16
      %s19 = sphi 0, %s17
      %s20 = sphi 0, %s18
      %s30 = sphi 0, %s32
      %s33 = sphi 0, %s30
      %s34 = sphi 0, %s33
      %s50 = sphi 0, %s34
      %s56 = sphi 0, %s58
      %s59 = sphi 0, %s56
      %s60 = sphi 0, %s59
      %s76 = sphi 0, %s60
      %s82 = sphi 0, %s84
      %s85 = sphi 0, %s82
      %s86 = sphi 0, %s85
      %s102 = sphi 0, %s86
    $region4: #{_lambda_.1} parent=1 // loop_header_branch
      %11 = sbr.rel (%p9) target = $region8
    $region5: #{_lambda_.1} parent=1 // loop_body
      %s13 = ssub.s32 %s8, 1
      %s14 = ssub.s32 %s8, 2
      %s21 = sadd.s32 1, %s16
      %p22 = scmp.ge.s32.totalorder %s21, 3
      %s23 = scalar_select %p22, 0, %s21
      %s24 = sadd.s32 1, %s15
      %s25 = scalar_select %p22, %s24, %s15
      %p26 = scmp.ge.s32.totalorder %s25, 2
      %s27 = scalar_select %p26, 0, %s25
      %s28 = ssub.s32 %s15, %s27
      %p29 = scmp.eq.s32.totalorder %s28, 0
      %s31 = sadd.s32 %s30, 1
      %s32 = scalar_select %p29, %s30, %s31
      %p35 = pneg %p29
      %p36 = scmp.eq.s32.totalorder %s8, 5
      %p37 = por %p35, %p36
      %p38 = scmp.ne.s32.totalorder %s30, %s33
      %p39 = scmp.eq.s32.totalorder %s8, 0
      %p40 = por %p38, %p39
      %p41 = scmp.ne.s32.totalorder %s30, %s33
      %p42 = scmp.eq.s32.totalorder %s13, 5
      %p43 = por %p41, %p42
      %p44 = scmp.ne.s32.totalorder %s33, %s34
      %p45 = scmp.eq.s32.totalorder %s13, 0
      %p46 = por %p44, %p45
      %p47 = scmp.ne.s32.totalorder %s33, %s34
      %p48 = scmp.eq.s32.totalorder %s14, 5
      %p49 = por %p47, %p48
      %p51 = scmp.ne.s32.totalorder %s34, %s50
      %p52 = scmp.eq.s32.totalorder %s14, 0
      %p53 = por %p51, %p52
      %s54 = ssub.s32 %s16, %s23
      %p55 = scmp.eq.s32.totalorder %s54, 0
      %s57 = sadd.s32 %s56, 1
      %s58 = scalar_select %p55, %s56, %s57
      %p61 = pneg %p55
      %p62 = scmp.eq.s32.totalorder %s8, 5
      %p63 = por %p61, %p62
      %p64 = scmp.ne.s32.totalorder %s56, %s59
      %p65 = scmp.eq.s32.totalorder %s8, 0
      %p66 = por %p64, %p65
      %p67 = scmp.ne.s32.totalorder %s56, %s59
      %p68 = scmp.eq.s32.totalorder %s13, 5
      %p69 = por %p67, %p68
      %p70 = scmp.ne.s32.totalorder %s59, %s60
      %p71 = scmp.eq.s32.totalorder %s13, 0
      %p72 = por %p70, %p71
      %p73 = scmp.ne.s32.totalorder %s59, %s60
      %p74 = scmp.eq.s32.totalorder %s14, 5
      %p75 = por %p73, %p74
      %p77 = scmp.ne.s32.totalorder %s60, %s76
      %p78 = scmp.eq.s32.totalorder %s14, 0
      %p79 = por %p77, %p78
      %s80 = ssub.s32 %s15, %s27
      %p81 = scmp.eq.s32.totalorder %s80, 0
      %s83 = sadd.s32 %s82, 1
      %s84 = scalar_select %p81, %s82, %s83
      %p87 = pneg %p81
      %p88 = scmp.eq.s32.totalorder %s8, 5
      %p89 = por %p87, %p88
      %p90 = scmp.ne.s32.totalorder %s82, %s85
      %p91 = scmp.eq.s32.totalorder %s8, 0
      %p92 = por %p90, %p91
      %p93 = scmp.ne.s32.totalorder %s82, %s85
      %p94 = scmp.eq.s32.totalorder %s13, 5
      %p95 = por %p93, %p94
      %p96 = scmp.ne.s32.totalorder %s85, %s86
      %p97 = scmp.eq.s32.totalorder %s13, 0
      %p98 = por %p96, %p97
      %p99 = scmp.ne.s32.totalorder %s85, %s86
      %p100 = scmp.eq.s32.totalorder %s14, 5
      %p101 = por %p99, %p100
      %p103 = scmp.ne.s32.totalorder %s86, %s102
      %p104 = scmp.eq.s32.totalorder %s14, 0
      %p105 = por %p103, %p104
      %p106 = scmp.le.s32.totalorder 1, %s8
      %p107 = scmp.lt.s32.totalorder %s8, 7
      %p108 = pnand %p106, %p107
      %p109 = pneg %p108
      // Predicated region
      $region9: #{_lambda_.1} parent=5 // pred_check
        _
      $region10: #{_lambda_.1} parent=5 // pred_check_branch
        %111 = sbr.rel (%p108) target = $region12
      $region11: #{_lambda_.1} parent=5 // pred_region
        %s112 = ssub.s32 %s8, 1
      $region12: #{_lambda_.1} parent=5 // pred_fallthru
        _
      %p113 = scmp.lt.s32.totalorder %s8, 6
      // Predicated region
      $region13: #{_lambda_.1} parent=5 // pred_check
        %p114 = pneg %p113
      $region14: #{_lambda_.1} parent=5 // pred_check_branch
        %116 = sbr.rel (%p114) target = $region16
      $region15: #{_lambda_.1} parent=5 // pred_region
        // Predicated region
        $region17: #{_lambda_.1} parent=15 // pred_check
          %p117 = pneg %p40
        $region18: #{_lambda_.1} parent=15 // pred_check_branch
          %119 = sbr.rel (%p117) target = $region20
        $region19: #{_lambda_.1} parent=15 // pred_region
          %s120 = smul.u32 2, %s15
          %p121 = scmp.lt.s32.totalorder %s120, 3
          %s122 = scalar_select %p121, %s120, 3
          %s123 = smul.addr %s122, 4
          %s124 = scalar_lea.vmem %s0, %s123
          %s125 = smul.u32 2, %s15
        $region20: #{_lambda_.1} parent=15 // pred_fallthru
          _
        // Predicated region
        $region21: #{_lambda_.1} parent=15 // pred_check
          %p126 = pneg %p66
        $region22: #{_lambda_.1} parent=15 // pred_check_branch
          %128 = sbr.rel (%p126) target = $region24
        $region23: #{_lambda_.1} parent=15 // pred_region
          %s129 = sand.u32 %s56, 1
          %s130 = sand.u32 %s56, 1
          %s131 = smul.addr %s130, 32
          %s132 = scalar_lea.vmem [#allocation5], %s131
          %s133 = smul.addr %s16, 4
          %s134 = scalar_lea.vmem %s1, %s133
          // Predicated region
          $region25: #{_lambda_.1} parent=23 // pred_check
            _
          $region26: #{_lambda_.1} parent=23 // pred_check_branch
            %136 = sbr.rel (0) target = $region28
          $region27: #{_lambda_.1} parent=23 // pred_region
            // Predicated region
            $region29: #{_lambda_.1} parent=27 // pred_check
              _
            $region30: #{_lambda_.1} parent=27 // pred_check_branch
              %138 = sbr.rel target = $region32
            $region31: #{_lambda_.1} parent=27 // pred_region
              // Predicated region
              $region44: #{_lambda_.1} parent=31 // pred_check
                _
              $region45: #{_lambda_.1} parent=31 // pred_check_branch
                %168 = sbr.rel (0) target = $region47
              $region46: #{_lambda_.1} parent=31 // pred_region
                loop: start=0, step=1, limit=1
                $region48: #{_lambda_.1} parent=46 // loop_pre_header
                  _
                $region49: #{_lambda_.1} parent=46 // loop_header
                  %s170 = sphi 0, %s174
                  %p171 = scmp.ge.s32.totalorder %s170, 1
                  %s175 = sphi %s134, %s134
                  %s176 = sphi %s132, %s132
                $region50: #{_lambda_.1} parent=46 // loop_header_branch
                  %173 = sbr.rel (%p171) target = $region54
                $region51: #{_lambda_.1} parent=46 // loop_body
                  _
                $region52: #{_lambda_.1} parent=46 // loop_footer
                  %s174 = sadd.s32 1, %s170
                $region53: #{_lambda_.1} parent=46 // loop_footer_branch
                  %169 = sbr.rel target = $region49
                $region54: #{_lambda_.1} parent=46 // loop_exit
                  _
                %s178 = ssub.s32 16, 1
                loop: start=0, step=1, limit=1
                $region55: #{_lambda_.1} parent=46 // loop_pre_header
                  _
                $region56: #{_lambda_.1} parent=46 // loop_header
                  %s180 = sphi 0, %s184
                  %p181 = scmp.ge.s32.totalorder %s180, 1
                  %s185 = sphi %s134, %s134
                  %s186 = sphi %s132, %s132
                $region57: #{_lambda_.1} parent=46 // loop_header_branch
                  %183 = sbr.rel (%p181) target = $region61
                $region58: #{_lambda_.1} parent=46 // loop_body
                  %v187 = vld [vmem:[%s185] sm:%s178]
                  %188 = vst [vmem:[%s186] sm:%s178] %v187
                  %v189 = vld [vmem:[%s185 + $0xc] sm:%s178]
                  %190 = vst [vmem:[%s186 + $0x4] sm:%s178] %v189
                  %v191 = vld [vmem:[%s185 + $0x18] sm:%s178]
                  %192 = vst [vmem:[%s186 + $0x8] sm:%s178] %v191
                  %v193 = vld [vmem:[%s185 + $0x24] sm:%s178]
                  %194 = vst [vmem:[%s186 + $0xc] sm:%s178] %v193
                  %v195 = vld [vmem:[%s185 + $0x30] sm:%s178]
                  %196 = vst [vmem:[%s186 + $0x10] sm:%s178] %v195
                  %v197 = vld [vmem:[%s185 + $0x3c] sm:%s178]
                  %198 = vst [vmem:[%s186 + $0x14] sm:%s178] %v197
                  %v199 = vld [vmem:[%s185 + $0x48] sm:%s178]
                  %200 = vst [vmem:[%s186 + $0x18] sm:%s178] %v199
                  %v201 = vld [vmem:[%s185 + $0x54] sm:%s178]
                  %202 = vst [vmem:[%s186 + $0x1c] sm:%s178] %v201
                $region59: #{_lambda_.1} parent=46 // loop_footer
                  %s184 = sadd.s32 1, %s180
                $region60: #{_lambda_.1} parent=46 // loop_footer_branch
                  %179 = sbr.rel target = $region56
                $region61: #{_lambda_.1} parent=46 // loop_exit
                  _
              $region47: #{_lambda_.1} parent=31 // pred_fallthru
                _
            $region32: #{_lambda_.1} parent=27 // pred_fallthru
              _
            // Predicated region
            $region33: #{_lambda_.1} parent=27 // pred_check
              _
            $region34: #{_lambda_.1} parent=27 // pred_check_branch
              %140 = sbr.rel (0) target = $region36
            $region35: #{_lambda_.1} parent=27 // pred_region
              %s142 = ssub.s32 16, 1
              loop: start=0, step=1, limit=1
              $region37: #{_lambda_.1} parent=35 // loop_pre_header
                _
              $region38: #{_lambda_.1} parent=35 // loop_header
                %s144 = sphi 0, %s148
                %p145 = scmp.ge.s32.totalorder %s144, 1
                %s149 = sphi %s134, %s134
                %s150 = sphi %s132, %s132
              $region39: #{_lambda_.1} parent=35 // loop_header_branch
                %147 = sbr.rel (%p145) target = $region43
              $region40: #{_lambda_.1} parent=35 // loop_body
                %v151 = vld [vmem:[%s149] sm:%s142]
                %152 = vst [vmem:[%s150] sm:%s142] %v151
                %v153 = vld [vmem:[%s149 + $0xc] sm:%s142]
                %154 = vst [vmem:[%s150 + $0x4] sm:%s142] %v153
                %v155 = vld [vmem:[%s149 + $0x18] sm:%s142]
                %156 = vst [vmem:[%s150 + $0x8] sm:%s142] %v155
                %v157 = vld [vmem:[%s149 + $0x24] sm:%s142]
                %158 = vst [vmem:[%s150 + $0xc] sm:%s142] %v157
                %v159 = vld [vmem:[%s149 + $0x30] sm:%s142]
                %160 = vst [vmem:[%s150 + $0x10] sm:%s142] %v159
                %v161 = vld [vmem:[%s149 + $0x3c] sm:%s142]
                %162 = vst [vmem:[%s150 + $0x14] sm:%s142] %v161
                %v163 = vld [vmem:[%s149 + $0x48] sm:%s142]
                %164 = vst [vmem:[%s150 + $0x18] sm:%s142] %v163
                %v165 = vld [vmem:[%s149 + $0x54] sm:%s142]
                %166 = vst [vmem:[%s150 + $0x1c] sm:%s142] %v165
              $region41: #{_lambda_.1} parent=35 // loop_footer
                %s148 = sadd.s32 1, %s144
              $region42: #{_lambda_.1} parent=35 // loop_footer_branch
                %143 = sbr.rel target = $region38
              $region43: #{_lambda_.1} parent=35 // loop_exit
                _
            $region36: #{_lambda_.1} parent=27 // pred_fallthru
              _
          $region28: #{_lambda_.1} parent=23 // pred_fallthru
            _
          %203 = vnop
        $region24: #{_lambda_.1} parent=15 // pred_fallthru
          _
      $region16: #{_lambda_.1} parent=5 // pred_fallthru
        _
      %p204 = scmp.le.s32.totalorder 1, %s8
      %p205 = scmp.lt.s32.totalorder %s8, 7
      %p206 = pnand %p204, %p205
      %p207 = pneg %p206
      // Predicated region
      $region62: #{_lambda_.1} parent=5 // pred_check
        _
      $region63: #{_lambda_.1} parent=5 // pred_check_branch
        %209 = sbr.rel (%p206) target = $region65
      $region64: #{_lambda_.1} parent=5 // pred_region
        %s210 = ssub.s32 %s8, 1
        %s211 = sand.u32 %s59, 1
        %s212 = sand.u32 %s59, 1
        %s213 = smul.addr %s212, 32
        %s214 = scalar_lea.vmem [#allocation5], %s213
        // Predicated region
        $region66: #{_lambda_.1} parent=64 // pred_check
          %p215 = pneg %p72
        $region67: #{_lambda_.1} parent=64 // pred_check_branch
          %217 = sbr.rel (%p215) target = $region69
        $region68: #{_lambda_.1} parent=64 // pred_region
          _
        $region69: #{_lambda_.1} parent=64 // pred_fallthru
          _
        %s218 = smul.u32 2, %s17
        %p219 = scmp.lt.s32.totalorder %s218, 3
        %s220 = scalar_select %p219, %s218, 3
        %s221 = smul.addr %s220, 4
        %s222 = scalar_lea.vmem %s0, %s221
        %p223 = pneg %p46
        %p224 = pneg %p43
        %s225 = sand.u32 %s59, 1
        %s226 = sand.u32 %s59, 1
        %s227 = smul.addr %s226, 32
        %s228 = scalar_lea.vmem [#allocation5], %s227
        %p229 = pneg %p72
        %p230 = pneg %p69
        %p231 = pneg %p98
        %p232 = pneg %p95
        %s233 = smul.u32 2, %s17
        %p234 = scmp.lt.s32.totalorder %s233, 3
        %s235 = scalar_select %p234, %s233, 3
        %s236 = smul.addr %s235, 3
        %s237 = smul.addr %s236, 8
        %s238 = scalar_lea.vmem %s2, %s237
        %s239 = smul.u32 2, %s17
        %p240 = scmp.lt.s32.totalorder %s239, 3
        %s241 = scalar_select %p240, %s239, 3
        %s242 = smul.addr %s241, 4
        %s243 = scalar_lea.vmem %s0, %s242
        %s244 = smul.u32 2, %s17
        %s245 = smul.u32 2, %s17
        %p246 = scmp.lt.s32.totalorder %s245, 3
        %s247 = scalar_select %p246, %s245, 3
        %s248 = smul.addr %s247, 3
        %s249 = smul.addr %s248, 8
        %s250 = scalar_lea.vmem %s2, %s249
        %s251 = smul.u32 2, %s17
        %p253 = scmp.eq.s32.totalorder %s18, 0
        // Predicated region
        $region70: #{_lambda_.1} parent=64 // pred_check
          %p254 = pneg %p253
        $region71: #{_lambda_.1} parent=64 // pred_check_branch
          %256 = sbr.rel (%p254) target = $region73
        $region72: #{_lambda_.1} parent=64 // pred_region
          %vm257 = vcmask 7168
          %258 = vst.msk [vmem:[#allocation3] sm:$0xff] %vm257, -inf
          %259 = vst.msk [vmem:[#allocation3 + $0x8] sm:$0xff] %vm257, -inf
          %260 = vst.msk [vmem:[#allocation4] sm:$0xff] %vm257, 0.0
          %261 = vst.msk [vmem:[#allocation4 + $0x8] sm:$0xff] %vm257, 0.0
        $region73: #{_lambda_.1} parent=64 // pred_fallthru
          _
        %v262 = vld [vmem:[%s243] sm:$0xf]
        %v263 = vld [vmem:[%s243 + $0x4] sm:$0xf]
        %v264 = vld [vmem:[%s214] sm:$0xf]
        %v265 = vld [vmem:[%s214 + $0x4] sm:$0xf]
        %v266 = vld [vmem:[%s214 + $0x8] sm:$0xf]
        %v267 = vld [vmem:[%s214 + $0xc] sm:$0xf]
        %v268 = vld [vmem:[%s214 + $0x10] sm:$0xf]
        %v269 = vld [vmem:[%s214 + $0x14] sm:$0xf]
        %v270 = vld [vmem:[%s214 + $0x18] sm:$0xf]
        %v271 = vld [vmem:[%s214 + $0x1c] sm:$0xf]
        %v274 = vunpack.c.l.b16 %v262
        %v275 = vunpack.c.l.b16 %v263
        %v276 = vpack.c.b16 %v275, %v274
        %v285 = vunpack.c.l.b16 %v264
        %v286 = vunpack.c.l.b16 %v265
        %v287 = vunpack.c.l.b16 %v266
        %v288 = vunpack.c.l.b16 %v267
        %v289 = vunpack.c.l.b16 %v268
        %v290 = vunpack.c.l.b16 %v269
        %v291 = vunpack.c.l.b16 %v270
        %v292 = vunpack.c.l.b16 %v271
        %v293 = vpack.c.b16 %v286, %v285
        %v294 = vpack.c.b16 %v288, %v287
        %v295 = vpack.c.b16 %v290, %v289
        %v296 = vpack.c.b16 %v292, %v291
        %vm301 = vcmask 523264
        %v303 = vsel %vm301, %v276, 0
        %305 = vmatpush.bf16.msra.mxu0 0
        %306 = vmatpush.bf16.msra.mxu0 0
        %307 = vmatpush.bf16.msra.mxu0 0
        %308 = vmatpush.bf16.msra.mxu0 0
        %309 = vmatpush.bf16.msra.mxu0 %v296
        %310 = vmatpush.bf16.msra.mxu0 %v295
        %311 = vmatpush.bf16.msra.mxu0 %v294
        %312 = vmatpush.bf16.msra.mxu0 %v293
        %313 = vmatmul.bf16.gmra.mxu0 %v303
        %v314 = vpop.f32.mrf.mxu0
        %v315 = vadd.f32 0.0, %v314
        %v316 = vpop.f32.mrf.mxu0
        %v317 = vadd.f32 0.0, %v316
        %318 = vdwg.mxu0
        %s319 = smul.u32 %s18, 16
        %s320 = scalar_lea.vmem [#allocation2], %s319
        %321 = vst [vmem:[%s320] sm:$0xff] %v315
        %322 = vst [vmem:[%s320 + $0x8] sm:$0xff] %v317
        %s323 = smul.u32 %s18, 128
        %v324 = vlaneseq
        %v325 = vand.u32 %v324, 127
        %v326 = vstv %s323
        %v327 = vadd.s32 %v326, %v325
        %vm328 = vcmp.lt.s32.totalorder %v327, 300
        %v329 = vsel %vm328, 1, 0
        %vm330 = vcmp.eq.s32.totalorder %v329, 1
        %v331 = vsel %vm330, %v315, -inf
        %v332 = vsel %vm330, %v317, -inf
        %v333 = vld [vmem:[#allocation3] sm:$0xff]
        %v334 = vld [vmem:[#allocation3 + $0x8] sm:$0xff]
        %335 = vmax.xlane.f32.xlu0 %v331
        %v336 = vpop.xlane.xlu0 %335
        %337 = vmax.xlane.f32.xlu0 %v332
        %v338 = vpop.xlane.xlu0 %337
        %v339 = vmax.f32 %v333, %v336
        %v340 = vmax.f32 %v334, %v338
        %v341 = vsub.f32 %v333, %v339
        %v342 = vsub.f32 %v334, %v340
        %v343 = vmul.f32 %v341, 1.442695
        %v344 = vpow.pop %v343
        %v345 = vmul.f32 %v342, 1.442695
        %v346 = vpow.pop %v345
        %v347 = vld [vmem:[#allocation4] sm:$0xff]
        %v348 = vld [vmem:[#allocation4 + $0x8] sm:$0xff]
        %v349 = vmul.f32 %v344, %v347
        %v350 = vmul.f32 %v346, %v348
        %352 = vset.pattern.permute.xlu0 0
        %353 = vperm.xlu0 %352, %v339
        %v354 = vpop.permute.xlu0 %353
        %357 = vset.pattern.permute.xlu0 0
        %358 = vperm.xlu0 %357, %v340
        %v359 = vpop.permute.xlu0 %358
        %v361 = vsub.f32 %v331, %v354
        %v362 = vsub.f32 %v332, %v359
        %v363 = vmul.f32 %v361, 1.442695
        %v364 = vpow.pop %v363
        %v365 = vmul.f32 %v362, 1.442695
        %v366 = vpow.pop %v365
        %367 = vadd.xlane.f32.xlu0 %v364
        %v368 = vpop.xlane.xlu0 %367
        %369 = vadd.xlane.f32.xlu0 %v366
        %v370 = vpop.xlane.xlu0 %369
        %v371 = vadd.f32 %v349, %v368
        %v372 = vadd.f32 %v350, %v370
        %vm373 = vcmask 7168
        %374 = vst.msk [vmem:[#allocation4] sm:$0xff] %vm373, %v371
        %375 = vst.msk [vmem:[#allocation4 + $0x8] sm:$0xff] %vm373, %v372
        %376 = vst.msk [vmem:[#allocation3] sm:$0xff] %vm373, %v339
        %377 = vst.msk [vmem:[#allocation3 + $0x8] sm:$0xff] %vm373, %v340
        %p378 = scmp.eq.s32.totalorder %s18, 2
        // Predicated region
        $region74: #{_lambda_.1} parent=64 // pred_check
          %p379 = pneg %p378
        $region75: #{_lambda_.1} parent=64 // pred_check_branch
          %381 = sbr.rel (%p379) target = $region77
        $region76: #{_lambda_.1} parent=64 // pred_region
          %v382 = vld [vmem:[#allocation3] sm:$0xff]
          %v383 = vld [vmem:[#allocation3 + $0x8] sm:$0xff]
          %v384 = vld [vmem:[#allocation4] sm:$0xff]
          %v385 = vld [vmem:[#allocation4 + $0x8] sm:$0xff]
          %v386 = vlog2.pop %v384
          %v387 = vmul.f32 %v386, 0.6931472
          %v388 = vlog2.pop %v385
          %v389 = vmul.f32 %v388, 0.6931472
          %v390 = vadd.f32 %v382, %v387
          %v391 = vadd.f32 %v383, %v389
          %v392 = vld [vmem:[#allocation2] sm:$0xff]
          %v393 = vld [vmem:[#allocation2 + $0x8] sm:$0xff]
          %395 = vset.pattern.permute.xlu0 0
          %396 = vperm.xlu0 %395, %v390
          %v397 = vpop.permute.xlu0 %396
          %400 = vset.pattern.permute.xlu0 0
          %401 = vperm.xlu0 %400, %v391
          %v402 = vpop.permute.xlu0 %401
          %v404 = vsub.f32 %v392, %v397
          %v405 = vsub.f32 %v393, %v402
          %406 = vst [vmem:[%s250] sm:$0xff] %v404
          %407 = vst [vmem:[%s250 + $0x18] sm:$0xff] %v405
          %s408 = scalar_lea.vmem [#allocation2], 16
          %v409 = vld [vmem:[%s408] sm:$0xff]
          %v410 = vld [vmem:[%s408 + $0x8] sm:$0xff]
          %v411 = vsub.f32 %v409, %v397
          %v412 = vsub.f32 %v410, %v402
          %413 = vst [vmem:[%s250 + $0x8] sm:$0xff] %v411
          %414 = vst [vmem:[%s250 + $0x20] sm:$0xff] %v412
          %s415 = scalar_lea.vmem [#allocation2], 32
          %v416 = vld [vmem:[%s415] sm:$0xff]
          %v417 = vld [vmem:[%s415 + $0x8] sm:$0xff]
          %v418 = vsub.f32 %v416, %v397
          %v419 = vsub.f32 %v417, %v402
          %420 = vst [vmem:[%s250 + $0x10] sm:$0xff] %v418
          %421 = vst [vmem:[%s250 + $0x28] sm:$0xff] %v419
        $region77: #{_lambda_.1} parent=64 // pred_fallthru
          _
        %s422 = smul.u32 2, %s17
        %p423 = scmp.lt.s32.totalorder %s422, 3
        %s424 = scalar_select %p423, %s422, 3
        %s425 = smul.addr %s424, 3
        %s426 = smul.addr %s425, 8
        %s427 = scalar_lea.vmem %s2, %s426
        // Predicated region
        $region78: #{_lambda_.1} parent=64 // pred_check
          %p428 = pneg %p95
        $region79: #{_lambda_.1} parent=64 // pred_check_branch
          %430 = sbr.rel (%p428) target = $region81
        $region80: #{_lambda_.1} parent=64 // pred_region
          %s431 = smul.u32 2, %s17
        $region81: #{_lambda_.1} parent=64 // pred_fallthru
          _
      $region65: #{_lambda_.1} parent=5 // pred_fallthru
        _
      %p432 = scmp.le.s32.totalorder 2, %s8
      // Predicated region
      $region82: #{_lambda_.1} parent=5 // pred_check
        %p433 = pneg %p432
      $region83: #{_lambda_.1} parent=5 // pred_check_branch
        %435 = sbr.rel (%p433) target = $region85
      $region84: #{_lambda_.1} parent=5 // pred_region
        %s436 = ssub.s32 %s8, 2
        // Predicated region
        $region86: #{_lambda_.1} parent=84 // pred_check
          %p437 = pneg %p101
        $region87: #{_lambda_.1} parent=84 // pred_check_branch
          %439 = sbr.rel (%p437) target = $region89
        $region88: #{_lambda_.1} parent=84 // pred_region
          %s440 = smul.u32 2, %s19
          %p441 = scmp.lt.s32.totalorder %s440, 3
          %s442 = scalar_select %p441, %s440, 3
          %s443 = smul.addr %s442, 3
          %s444 = smul.addr %s443, 8
          %s445 = scalar_lea.vmem %s2, %s444
        $region89: #{_lambda_.1} parent=84 // pred_fallthru
          _
      $region85: #{_lambda_.1} parent=5 // pred_fallthru
        _
    $region6: #{_lambda_.1} parent=1 // loop_footer
      %s12 = sadd.s32 1, %s8
    $region7: #{_lambda_.1} parent=1 // loop_footer_branch
      %7 = sbr.rel target = $region3
    $region8: #{_lambda_.1} parent=1 // loop_exit
      _

</llo_original>
